<compile_context>
chip_gen: v7x
topology: tpu7x:2x2x1
jax: 0.10.0
libtpu: 0.0.40
codegen_flags: <defaults>
</compile_context>

<pallas_src>
import functools

import numpy as np
import jax
import jax.numpy as jnp
from jax.experimental import pallas as pl
from jax.experimental.pallas import tpu as pltpu


def _coset_structure(D):
    """Coarse diagonal strides and coset offsets of the sub-lattice D @ Z^2."""
    D = np.asarray(D, dtype=np.int64)
    assert D.shape == (2, 2)
    a, b = int(D[0, 0]), int(D[0, 1])
    c, d = int(D[1, 0]), int(D[1, 1])
    det = a * d - b * c
    assert det != 0, "downsampling matrix must be non-singular"
    adj = np.array([[d, -b], [-c, a]], dtype=np.int64)

    def member(v):  # is integer vector v in D @ Z^2 ?
        w = adj @ np.asarray(v, dtype=np.int64)
        return int(w[0]) % det == 0 and int(w[1]) % det == 0

    strides = []
    for axis in range(2):
        s = 1
        while not member([s if axis == 0 else 0, s if axis == 1 else 0]):
            s += 1  # terminates: |det| * e_axis is always in D @ Z^2
        strides.append(s)
    s0, s1 = strides
    offsets = sorted(
        (r0, r1) for r0 in range(s0) for r1 in range(s1) if member((r0, r1))
    )
    assert len(offsets) == (s0 * s1) // abs(det)
    return (s0, s1), offsets


def _round_up(x, m):
    return ((x + m - 1) // m) * m


def _vmem_budget():
    """(vmem_limit_bytes, tiling budget) derived from the actual TPU generation."""
    cap = 64 * 1024 * 1024  # conservative fallback == v7x per-core VMEM
    try:
        info = pltpu.get_tpu_info()
        v = getattr(info, "vmem_capacity_bytes", None)
        if isinstance(v, (int, np.integer)) and int(v) > 0:
            cap = int(v)
    except Exception:
        pass
    limit = (cap * 3) // 4  # ~96 MiB on v5e/v6e (128 MiB), ~48 MiB on v7x (64 MiB)
    return limit, limit // 2


def _pick_fold(total_rows, W, s0, K, Wout, sel_cap_elems=1 << 21):
    """Row-fold factor f: multiple of s0, divides NC*H.

    Chosen so the in-kernel lane widths f*W (input) and (f//s0)*K*Wout (output)
    are both >= 128 where divisibility allows, without letting the hoisted
    one-hot selector (f*W x (f//s0)*K*Wout) grow past sel_cap_elems.
    """
    chosen = s0
    f = s0
    while f <= total_rows:
        if total_rows % f == 0:
            lin = f * W
            lout = (f // s0) * K * Wout
            if lin * lout > sel_cap_elems and f > s0:
                break
            chosen = f
            if lin >= 128 and lout >= 128:
                break
        if f * W >= 4096:  # no benefit in folding further; bounds the search too
            break
        f += s0
    return chosen


def _pick_tr(R, Lin, Lout, in_esize, out_esize, sel_bytes, budget):
    """Rows per grid step: largest sublane-aligned tile that fits the VMEM budget,
    capped so the grid keeps >= 2 steps (v7x megacore) when there is enough work."""
    if R <= 8:
        return R
    cap = min(_round_up(pl.cdiv(R, 2), 8), _round_up(R, 8))
    per_row = 2 * (Lin * in_esize + Lout * out_esize)  # double-buffered in + out
    avail = budget - 2 * sel_bytes                      # resident selector (2 bufs)
    if avail <= 8 * per_row:
        return 8
    tr = min(cap, (avail // per_row) // 8 * 8)
    return max(8, tr)


def _downsample_kernel(x_ref, sel_ref, o_ref, *, needs_cast):
    """x_ref: (TR, f*W) fat-row slab.  o_ref: (TR, (f/s0)*K*Wout) fused coset slab."""
    x = x_ref[...]
    if needs_cast:
        # TODO(synk): integer inputs with |v| > 2^24 lose exactness through the
        # f32 MXU path; a true lane-gather would be required for wide ints.
        x = x.astype(jnp.float32)
    # One fused one-hot matmul performs BOTH the H- and W-axis decimations.
    # Exact for finite inputs (single unit coefficient per output column).
    # TODO(synk): Inf/NaN at dropped lattice sites pollute the matmul (0*Inf=NaN);
    # a true lane-gather would remove this divergence from the strided slice.
    y = jnp.dot(x, sel_ref[...], preferred_element_type=jnp.float32)
    o_ref[...] = y.astype(o_ref.dtype)


def lattice_downsample(x, strides, offsets):
    """x: (N, C, H, W) single-coset (Cartesian) lattice tensor -> tuple of cosets."""
    N, C, H, W = x.shape
    s0, s1 = strides
    # TODO(synk): ragged coset extents (H % s0 != 0 or W % s1 != 0) not handled.
    assert H % s0 == 0 and W % s1 == 0
    Hout, Wout = H // s0, W // s1
    K = len(offsets)
    NC = N * C

    dense = np.dtype(x.dtype) in (np.dtype(jnp.bfloat16), np.dtype(jnp.float32))
    sel_dtype = x.dtype if dense else jnp.float32
    needs_cast = not dense

    # Fold f whole image rows into each "fat" row so loads AND stores are
    # lane-dense.  f is a multiple of s0 and divides NC*H, so the reshape is a
    # free contiguous view; fat rows may straddle plane boundaries safely
    # because s0 | H keeps the row-parity pattern uniform.
    f = _pick_fold(NC * H, W, s0, K, Wout)
    g = f // s0
    R = (NC * H) // f
    Lin = f * W
    Lout = g * K * Wout

    # Hoisted fused one-hot selector (built once on host, DMA'd once via a
    # constant index_map):  input fat-lane (m*s0+r0)*W + r1 + s1*j
    #                    -> output fat-lane m*K*Wout + k*Wout + j.
    sel_np = np.zeros((Lin, Lout), dtype=np.float32)
    j = np.arange(Wout)
    for m in range(g):
        for k, (r0, r1) in enumerate(offsets):
            sel_np[(m * s0 + r0) * W + r1 + s1 * j, m * K * Wout + k * Wout + j] = 1.0
    sel = jnp.asarray(sel_np, dtype=sel_dtype)

    in_esize = int(np.dtype(x.dtype).itemsize)
    sel_esize = int(np.dtype(sel_dtype).itemsize)
    vmem_limit, budget = _vmem_budget()
    TR = _pick_tr(R, Lin, Lout, in_esize, in_esize, Lin * Lout * sel_esize, budget)
    grid = (pl.cdiv(R, TR),)

    x2 = x.reshape(R, Lin)  # free reshape; fat rows stacked along sublanes

    kernel = functools.partial(_downsample_kernel, needs_cast=needs_cast)

    out = pl.pallas_call(
        kernel,
        out_shape=jax.ShapeDtypeStruct((R, Lout), x.dtype),
        grid=grid,
        in_specs=[
            pl.BlockSpec((TR, Lin), lambda i: (i, 0)),     # TR fat rows
            pl.BlockSpec((Lin, Lout), lambda i: (0, 0)),   # resident fused selector
        ],
        out_specs=pl.BlockSpec((TR, Lout), lambda i: (i, 0)),  # lane-dense output
        compiler_params=pltpu.CompilerParams(
            dimension_semantics=("parallel",),
            vmem_limit_bytes=vmem_limit,
        ),
    )(x2, sel)

    # Free reshapes / cheap XLA slices on the wrapper side: split cosets out of
    # the single lane-dense slab.
    flat = out.reshape(NC * Hout, K * Wout)
    return tuple(
        flat[:, k * Wout:(k + 1) * Wout].reshape(N, C, Hout, Wout)
        for k in range(K)
    )


class LatticeDownsample:
    """Pallas port of ncdl.nn.modules.resample.LatticeDownsample.

    Implements the forward pass for a Cartesian (single-coset) parent lattice.
    The downsampled "lattice tensor" is returned as a tuple of coset arrays.
    No trainable parameters exist in the original module.
    """

    # TODO(synk): multi-coset (non-Cartesian) parent lattices require ncdl's full
    # lattice algebra (coset matching / shift accounting); only the Cartesian
    # parent-lattice case is implemented here.

    def __init__(self, downsampling_matrix):
        self.smatrix = np.asarray(downsampling_matrix, dtype=np.int64)
        self.strides, self.offsets = _coset_structure(self.smatrix)

    def __call__(self, x):
        return lattice_downsample(x, self.strides, self.offsets)


if __name__ == "__main__":
    key = jax.random.PRNGKey(0)
    N, C, H, W = 2, 4, 16, 16
    x = jax.random.normal(key, (N, C, H, W), dtype=jnp.float32)

    # Quincunx downsampling matrix — the canonical ncdl example.
    D = np.array([[1, 1], [1, -1]], dtype=np.int64)

    mod = LatticeDownsample(D)
    cosets = mod(x)
    cosets = jax.block_until_ready(cosets)

    # Reference: the strided slices ncdl's downsample would produce per coset.
    s0, s1 = mod.strides
    ok = True
    for (r0, r1), got in zip(mod.offsets, cosets):
        ref = x[:, :, r0::s0, r1::s1]
        ok = ok and (got.shape == ref.shape) and (got.dtype == ref.dtype)
        ok = ok and bool(jnp.array_equal(got, ref))
    assert ok, "Pallas lattice downsample mismatch vs strided-slice reference"
    print("KERNEL_OK")
</pallas_src>

<mosaic_0001>
module attributes {stable_mosaic.version = 11 : i64} {
  func.func @_downsample_kernel(%arg0: i32, %arg1: memref<8x256xf32, #tpu.memory_space<vmem>>, %arg2: memref<256x128xf32, #tpu.memory_space<vmem>>, %arg3: memref<8x128xf32, #tpu.memory_space<vmem>>) attributes {dimension_semantics = [#tpu.dimension_semantics<parallel>], iteration_bounds = array<i64: 1>, scalar_prefetch = 0 : i64, scratch_operands = 0 : i64, tpu.core_type = #tpu.core_type<tc>, window_params = [{transform_indices = @transform_0, window_bounds = array<i64: 8, 256>}, {pipeline_mode = #tpu.pipeline_mode<synchronous>, transform_indices = @transform_1, window_bounds = array<i64: 256, 128>}, {transform_indices = @transform_2, window_bounds = array<i64: 8, 128>}]} {
    %c0 = arith.constant 0 : index
    %c0_0 = arith.constant 0 : index
    %0 = vector.load %arg1[%c0, %c0_0] : memref<8x256xf32, #tpu.memory_space<vmem>>, vector<8x256xf32>
    %c0_1 = arith.constant 0 : index
    %c0_2 = arith.constant 0 : index
    %1 = vector.load %arg2[%c0_1, %c0_2] : memref<256x128xf32, #tpu.memory_space<vmem>>, vector<256x128xf32>
    %cst = arith.constant dense<0.000000e+00> : vector<8x128xf32>
    %2 = tpu.matmul %0, %1, %cst {dimension_numbers = #tpu.dot_dimension_numbers<[1], [0], [0], [1], [0, 0, 1, 1], [], []>} : vector<8x256xf32>, vector<256x128xf32>, vector<8x128xf32> -> vector<8x128xf32>
    %c0_3 = arith.constant 0 : index
    %c0_4 = arith.constant 0 : index
    %3 = vector.load %arg3[%c0_3, %c0_4] : memref<8x128xf32, #tpu.memory_space<vmem>>, vector<8x128xf32>
    tpu.vector_store %arg3[%c0_3, %c0_4], %2 {strides = array<i32>} : memref<8x128xf32, #tpu.memory_space<vmem>>, vector<8x128xf32>,
    return
  }
  func.func @transform_0(%arg0: i32) -> (i32, i32) {
    %c0_i32 = arith.constant 0 : i32
    %c0_i32_0 = arith.constant 0 : i32
    return %arg0, %c0_i32 : i32, i32
  }
  func.func @transform_1(%arg0: i32) -> (i32, i32) {
    %c0_i32 = arith.constant 0 : i32
    %c0_i32_0 = arith.constant 0 : i32
    %c0_i32_1 = arith.constant 0 : i32
    return %c0_i32, %c0_i32_0 : i32, i32
  }
  func.func @transform_2(%arg0: i32) -> (i32, i32) {
    %c0_i32 = arith.constant 0 : i32
    %c0_i32_0 = arith.constant 0 : i32
    return %arg0, %c0_i32 : i32, i32
  }
}

</mosaic_0001>

<llo_original>
// kernel: tpu_custom_call.1
$region0: #{tpu_custom_call.1}
  #allocation0 [shape = 'u32[]', space=smem, size = 0x4, offset = 0x4, fixed_abs, tag = 'smem constant byte address 0x4 - core index']
  #allocation1 [shape = 'u32[144,128]{1,0:T(1,128)}', space=vmem, size = 0x12000, scoped, tag = 'internal scratch']
  %s0 = inlined_call_operand.hbm [shape: f32[8,256], index: 0, kind: input, shape index: {}]
  %s1 = inlined_call_operand.hbm [shape: f32[256,128], index: 1, kind: input, shape index: {}]
  %s2 = inlined_call_operand.hbm [shape: f32[8,128], index: 2, kind: output, shape index: {}]
  %s3 = sld [smem:[#allocation0]]
  $region26: #{tpu_custom_call.1} parent=0
    _
  %s5 = ssub.s32 1, %s3
  %s6 = scalar_select 0, %s5, %s3
  $region1: #{tpu_custom_call.1} parent=0
    #allocation2 [shape = 'u8[8192]{0}', space=vmem, size = 0x2000, scoped, tag = 'input window, operand 0, single buffered']
    #allocation3 [shape = 's32[1]{0}', space=sflag, size = 0x4, scoped, tag = 'scoped memory for tpu_custom_call.1']
    #allocation4 [shape = 's32[1]{0}', space=sflag, size = 0x4, scoped, tag = 'scoped memory for tpu_custom_call.1']
    #allocation5 [shape = 'u8[131072]{0}', space=vmem, size = 0x20000, scoped, tag = 'input window, operand 1, single buffered']
    #allocation6 [shape = 's32[1]{0}', space=sflag, size = 0x4, scoped, tag = 'scoped memory for tpu_custom_call.1']
    #allocation7 [shape = 'u8[4096]{0}', space=vmem, size = 0x1000, scoped, tag = 'output window, operand 0, single buffered']
    %7 = vsyncpa [#allocation3], 0
    %8 = vsyncpa [#allocation6], 0
    %9 = vsyncpa [#allocation4], 0
    // Predicated region
    $region2: #{tpu_custom_call.1} parent=1 // pred_check
      _
    $region3: #{tpu_custom_call.1} parent=1 // pred_check_branch
      %11 = sbr.rel (0) target = $region5
    $region4: #{tpu_custom_call.1} parent=1 // pred_region
      %s13 = ssub.s32 256, 256
      %14 = vsyncadd [#allocation3], %s13
      %s16 = sshll.u32 [#allocation2], 4
      %s17 = int_to_ptr.vmem [resolvable:$true] %s16
      %19 = dma.hbm_to_vmem [thread:$0]  %s0, 256, %s17, [#allocation3]
    $region5: #{tpu_custom_call.1} parent=1 // pred_fallthru
      _
    // Predicated region
    $region6: #{tpu_custom_call.1} parent=1 // pred_check
      _
    $region7: #{tpu_custom_call.1} parent=1 // pred_check_branch
      %21 = sbr.rel (0) target = $region9
    $region8: #{tpu_custom_call.1} parent=1 // pred_region
      %s23 = ssub.s32 4096, 4096
      %24 = vsyncadd [#allocation6], %s23
      %s25 = sshll.u32 [#allocation5], 4
      %s26 = int_to_ptr.vmem [resolvable:$true] %s25
      %31 = dma.hbm_to_vmem [thread:$0]  %s1, 4096, %s26, [#allocation6], 128, 128, 8
    $region9: #{tpu_custom_call.1} parent=1 // pred_fallthru
      _
    // Predicated region
    $region10: #{tpu_custom_call.1} parent=1 // pred_check
      _
    $region11: #{tpu_custom_call.1} parent=1 // pred_check_branch
      %33 = sbr.rel (0) target = $region13
    $region12: #{tpu_custom_call.1} parent=1 // pred_region
      %34 = dma.done [#allocation3], 256
    $region13: #{tpu_custom_call.1} parent=1 // pred_fallthru
      _
    // Predicated region
    $region14: #{tpu_custom_call.1} parent=1 // pred_check
      _
    $region15: #{tpu_custom_call.1} parent=1 // pred_check_branch
      %36 = sbr.rel (0) target = $region17
    $region16: #{tpu_custom_call.1} parent=1 // pred_region
      %37 = dma.done [#allocation6], 4096
    $region17: #{tpu_custom_call.1} parent=1 // pred_fallthru
      _
    %v38 = vld [vmem:[#allocation2] sm:$0xff]
    %v39 = vld [vmem:[#allocation2 + $0x8] sm:$0xff]
    %v40 = vld [vmem:[#allocation5] sm:$0xff]
    %v41 = vld [vmem:[#allocation5 + $0x8] sm:$0xff]
    %v42 = vld [vmem:[#allocation5 + $0x10] sm:$0xff]
    %v43 = vld [vmem:[#allocation5 + $0x18] sm:$0xff]
    %v44 = vld [vmem:[#allocation5 + $0x20] sm:$0xff]
    %v45 = vld [vmem:[#allocation5 + $0x28] sm:$0xff]
    %v46 = vld [vmem:[#allocation5 + $0x30] sm:$0xff]
    %v47 = vld [vmem:[#allocation5 + $0x38] sm:$0xff]
    %v48 = vld [vmem:[#allocation5 + $0x40] sm:$0xff]
    %v49 = vld [vmem:[#allocation5 + $0x48] sm:$0xff]
    %v50 = vld [vmem:[#allocation5 + $0x50] sm:$0xff]
    %v51 = vld [vmem:[#allocation5 + $0x58] sm:$0xff]
    %v52 = vld [vmem:[#allocation5 + $0x60] sm:$0xff]
    %v53 = vld [vmem:[#allocation5 + $0x68] sm:$0xff]
    %v54 = vld [vmem:[#allocation5 + $0x70] sm:$0xff]
    %v55 = vld [vmem:[#allocation5 + $0x78] sm:$0xff]
    %v56 = vld [vmem:[#allocation5 + $0x80] sm:$0xff]
    %v57 = vld [vmem:[#allocation5 + $0x88] sm:$0xff]
    %v58 = vld [vmem:[#allocation5 + $0x90] sm:$0xff]
    %v59 = vld [vmem:[#allocation5 + $0x98] sm:$0xff]
    %v60 = vld [vmem:[#allocation5 + $0xa0] sm:$0xff]
    %v61 = vld [vmem:[#allocation5 + $0xa8] sm:$0xff]
    %v62 = vld [vmem:[#allocation5 + $0xb0] sm:$0xff]
    %v63 = vld [vmem:[#allocation5 + $0xb8] sm:$0xff]
    %v64 = vld [vmem:[#allocation5 + $0xc0] sm:$0xff]
    %v65 = vld [vmem:[#allocation5 + $0xc8] sm:$0xff]
    %v66 = vld [vmem:[#allocation5 + $0xd0] sm:$0xff]
    %v67 = vld [vmem:[#allocation5 + $0xd8] sm:$0xff]
    %v68 = vld [vmem:[#allocation5 + $0xe0] sm:$0xff]
    %v69 = vld [vmem:[#allocation5 + $0xe8] sm:$0xff]
    %v70 = vld [vmem:[#allocation5 + $0xf0] sm:$0xff]
    %v71 = vld [vmem:[#allocation5 + $0xf8] sm:$0xff]
    %72 = vmatprep.subr.mxu0 0.0
    %73 = vmatpush1.msra.mxu0 %v40
    %74 = vmatprep.subr.mxu0 0.0
    %75 = vmatpush1.msra.mxu0 %v41
    %76 = vmatprep.subr.mxu0 0.0
    %77 = vmatpush1.msra.mxu0 %v42
    %78 = vmatprep.subr.mxu0 0.0
    %79 = vmatpush1.msra.mxu0 %v43
    %80 = vmatprep.subr.mxu0 0.0
    %81 = vmatpush1.msra.mxu0 %v44
    %82 = vmatprep.subr.mxu0 0.0
    %83 = vmatpush1.msra.mxu0 %v45
    %84 = vmatprep.subr.mxu0 0.0
    %85 = vmatpush1.msra.mxu0 %v46
    %86 = vmatprep.subr.mxu0 0.0
    %87 = vmatpush1.msra.mxu0 %v47
    %88 = vmatprep.subr.mxu0 0.0
    %89 = vmatpush1.msra.mxu0 %v48
    %90 = vmatprep.subr.mxu0 0.0
    %91 = vmatpush1.msra.mxu0 %v49
    %92 = vmatprep.subr.mxu0 0.0
    %93 = vmatpush1.msra.mxu0 %v50
    %94 = vmatprep.subr.mxu0 0.0
    %95 = vmatpush1.msra.mxu0 %v51
    %96 = vmatprep.subr.mxu0 0.0
    %97 = vmatpush1.msra.mxu0 %v52
    %98 = vmatprep.subr.mxu0 0.0
    %99 = vmatpush1.msra.mxu0 %v53
    %100 = vmatprep.subr.mxu0 0.0
    %101 = vmatpush1.msra.mxu0 %v54
    %102 = vmatprep.subr.mxu0 0.0
    %103 = vmatpush1.msra.mxu0 %v55
    %104 = vmatprep.subr.mxu0 0.0
    %105 = vmatpush1.msra.mxu0 %v56
    %106 = vmatprep.subr.mxu0 0.0
    %107 = vmatpush1.msra.mxu0 %v57
    %108 = vmatprep.subr.mxu0 0.0
    %109 = vmatpush1.msra.mxu0 %v58
    %110 = vmatprep.subr.mxu0 0.0
    %111 = vmatpush1.msra.mxu0 %v59
    %112 = vmatprep.subr.mxu0 0.0
    %113 = vmatpush1.msra.mxu0 %v60
    %114 = vmatprep.subr.mxu0 0.0
    %115 = vmatpush1.msra.mxu0 %v61
    %116 = vmatprep.subr.mxu0 0.0
    %117 = vmatpush1.msra.mxu0 %v62
    %118 = vmatprep.subr.mxu0 0.0
    %119 = vmatpush1.msra.mxu0 %v63
    %120 = vmatprep.subr.mxu0 0.0
    %121 = vmatpush1.msra.mxu0 %v64
    %122 = vmatprep.subr.mxu0 0.0
    %123 = vmatpush1.msra.mxu0 %v65
    %124 = vmatprep.subr.mxu0 0.0
    %125 = vmatpush1.msra.mxu0 %v66
    %126 = vmatprep.subr.mxu0 0.0
    %127 = vmatpush1.msra.mxu0 %v67
    %128 = vmatprep.subr.mxu0 0.0
    %129 = vmatpush1.msra.mxu0 %v68
    %130 = vmatprep.subr.mxu0 0.0
    %131 = vmatpush1.msra.mxu0 %v69
    %132 = vmatprep.subr.mxu0 0.0
    %133 = vmatpush1.msra.mxu0 %v70
    %134 = vmatprep.subr.mxu0 0.0
    %135 = vmatpush1.msra.mxu0 %v71
    %136 = vmatprep.mubr.f32.mxu0 %v39
    %137 = vmatmul.mubr.f32.gmra.mrb[0].mxu0 %v38
    %v138 = vpop.f32.mrb[0].mxu0
    %v139 = vadd.f32 0.0, %v138
    %v140 = vpop.f32.mrb[0].mxu0
    %141 = vdwg.mxu0
    %142 = vst [vmem:[#allocation7] sm:$0xff] %v139
    // Predicated region
    $region18: #{tpu_custom_call.1} parent=1 // pred_check
      _
    $region19: #{tpu_custom_call.1} parent=1 // pred_check_branch
      %144 = sbr.rel (0) target = $region21
    $region20: #{tpu_custom_call.1} parent=1 // pred_region
      %s146 = ssub.s32 128, 128
      %147 = vsyncadd [#allocation4], %s146
      %s149 = sshll.u32 [#allocation7], 4
      %s150 = int_to_ptr.vmem [resolvable:$true] %s149
      %152 = dma.vmem_to_hbm [thread:$0]  %s150, 128, %s2, [#allocation4]
    $region21: #{tpu_custom_call.1} parent=1 // pred_fallthru
      _
    // Predicated region
    $region22: #{tpu_custom_call.1} parent=1 // pred_check
      _
    $region23: #{tpu_custom_call.1} parent=1 // pred_check_branch
      %154 = sbr.rel (0) target = $region25
    $region24: #{tpu_custom_call.1} parent=1 // pred_region
      %155 = dma.done [#allocation4], 128
    $region25: #{tpu_custom_call.1} parent=1 // pred_fallthru
      _
    %156 = vsyncpa [#allocation3], 1
    %157 = vsyncpa [#allocation6], 1
    %158 = vsyncpa [#allocation4], 1

</llo_original>
